<compile_context>
chip_gen: v7x
topology: tpu7x:2x2x1
jax: 0.10.0
libtpu: 0.0.40
codegen_flags: <defaults>
</compile_context>

<pallas_src>
import functools

import jax
import jax.numpy as jnp
from jax.experimental import pallas as pl
from jax.experimental.pallas import tpu as pltpu


def _round_up(x, m):
    return (x + m - 1) // m * m


def _vmem_capacity_bytes():
    """Physical per-core VMEM; conservative 64 MiB (v7x) if query unavailable."""
    try:
        cap = getattr(pltpu.get_tpu_info(), "vmem_capacity_bytes", None)
        if cap:
            return int(cap)
    except Exception:
        pass
    return 64 * 1024 * 1024


def _pick_tn(d_out_p, tn_max):
    """Largest multiple of 128 that divides d_out_p and is <= tn_max."""
    best = 128
    t = 128
    while t <= min(d_out_p, tn_max):
        if d_out_p % t == 0:
            best = t
        t += 128
    return best


def _vmem_estimate_bytes(bm, tn, d_in_p, H, x_itemsize, out_itemsize, w_itemsize):
    """Conservative VMEM footprint for one grid step.

    Weights are counted double-buffered so the no-Buffered(1) fallback also
    fits; x/out tiles double-buffered; bf16 activation scratch; ~4 live f32
    (bm, H) temps during the activation phase.
    """
    weights = 2 * ((d_in_p * H + H * tn) * w_itemsize + (3 * H + tn) * 4)
    io = 2 * bm * d_in_p * x_itemsize + 2 * bm * tn * out_itemsize
    scratch = bm * H * w_itemsize
    temps = 4 * bm * H * 4
    return weights + io + scratch + temps


def _solu_mlp_kernel(x_ref, w1_ref, b1_ref, gamma_ref, beta_ref, w2_ref, b2_ref,
                     o_ref, h_scratch, *, temperature, alpha, use_norm,
                     use_skip, use_pre_gelu, approx_gelu):
    j = pl.program_id(1)

    # ---- fc1 + SoLU (+ LN): once per batch tile, at the first output tile ----
    @pl.when(j == 0)
    def _():
        x = x_ref[...]
        h = jnp.dot(x.astype(w1_ref.dtype), w1_ref[...],
                    preferred_element_type=jnp.float32)
        h = h + b1_ref[...]                                     # (bm, H) f32

        if use_pre_gelu:
            h = jax.nn.gelu(h, approximate=approx_gelu)

        # SoLU: h * softmax(h / T), blended with GELU by alpha.  alpha is a
        # static Python float, so dead branches are pruned at trace time.
        if alpha != 0.0:
            z = h * (1.0 / temperature)
            z = z - jnp.max(z, axis=-1, keepdims=True)
            e = jnp.exp(z)
            inv_denom = pl.reciprocal(jnp.sum(e, axis=-1, keepdims=True),
                                      approx=True)
            s = e * inv_denom                                   # softmax(h/T)
        if alpha == 1.0:
            a = h * s
        elif alpha == 0.0:
            a = jax.nn.gelu(h, approximate=approx_gelu)
        else:
            # Single expression so z / e / s die early (fewer live (bm,H) temps).
            a = h * (alpha * s) + (1.0 - alpha) * jax.nn.gelu(
                h, approximate=approx_gelu)

        if use_norm:
            # One-pass LayerNorm: the two reductions are independent and can
            # overlap on the XLU; var = E[a^2] - mean^2.
            n_inv = 1.0 / a.shape[-1]
            mean = jnp.sum(a, axis=-1, keepdims=True) * n_inv
            mean_sq = jnp.sum(a * a, axis=-1, keepdims=True) * n_inv
            var = mean_sq - mean * mean
            a = (a - mean) * jax.lax.rsqrt(var + 1e-5)
            a = a * gamma_ref[...] + beta_ref[...]

        h_scratch[...] = a.astype(h_scratch.dtype)

    # ---- fc2 output tile: (bm, H) @ (H, tn), bf16 MXU, f32 accumulation ----
    out = jnp.dot(h_scratch[...], w2_ref[...],
                  preferred_element_type=jnp.float32)
    out = out + b2_ref[...]

    if use_skip:
        # Only reached when d_in == d_out and the output axis is untiled.
        out = out + x_ref[...].astype(jnp.float32)

    o_ref[...] = out.astype(o_ref.dtype)


def prepare_params(params, matmul_dtype=jnp.bfloat16):
    """Pad weights to lane multiples and cast MXU operands to bf16 ONCE.

    Doing this per forward call re-reads/re-writes both weight matrices in HBM
    on every call; amortize it across calls instead.  The hidden dim H is left
    unpadded (padding it without masking would corrupt softmax / LayerNorm).
    """
    w1, b1 = params["w1"], params["b1"]
    gamma, beta = params["gamma"], params["beta"]
    w2, b2 = params["w2"], params["b2"]
    d_in, H = w1.shape
    d_out = w2.shape[1]
    d_in_p = _round_up(d_in, 128)
    d_out_p = _round_up(d_out, 128)
    return {
        "w1": jnp.pad(w1, ((0, d_in_p - d_in), (0, 0))).astype(matmul_dtype),
        "b1": b1.astype(jnp.float32),
        "gamma": gamma.astype(jnp.float32),
        "beta": beta.astype(jnp.float32),
        "w2": jnp.pad(w2, ((0, 0), (0, d_out_p - d_out))).astype(matmul_dtype),
        "b2": jnp.pad(b2, ((0, 0), (0, d_out_p - d_out))).astype(jnp.float32),
        "d_in": d_in,
        "d_out": d_out,
        "hidden": H,
    }


def solu_mlp_forward(x, prepared, *, temperature=1.0, alpha=1.0, norm=True,
                     skip=False, pre_gelu=False, approx_gelu=False,
                     block_m=None, block_n=2048, cast_x_to_bf16=False):
    """x: (B, input_size).  `prepared` comes from prepare_params()."""
    w1, b1 = prepared["w1"], prepared["b1"]
    gamma, beta = prepared["gamma"], prepared["beta"]
    w2, b2 = prepared["w2"], prepared["b2"]
    d_in, d_out, H = prepared["d_in"], prepared["d_out"], prepared["hidden"]
    d_in_p, d_out_p = w1.shape[0], w2.shape[1]
    matmul_dtype = w1.dtype

    B = x.shape[0]
    out_dtype = x.dtype
    assert x.shape == (B, d_in)
    if skip:
        assert d_in == d_out, "skip connection requires input_size == output_size"

    # Per-generation VMEM budget: ~100 MiB / bm=512 on 128 MiB parts (v5e/v6e),
    # 48 MiB / bm=256 on 64 MiB parts (v7x).
    vmem_cap = _vmem_capacity_bytes()
    vmem_limit = max(int(min(vmem_cap * 0.78, vmem_cap - (16 << 20))),
                     32 * 1024 * 1024)
    if block_m is None:
        block_m = 512 if vmem_cap >= (96 << 20) else 256

    # Output (N) tiling: shrinks per-step w2/out VMEM and adds grid steps for
    # megacore at large d_out.  Disabled when skip=True (residual add needs the
    # whole x row against the whole output row).
    tn = d_out_p if skip else _pick_tn(d_out_p, block_n)

    x_itemsize = jnp.dtype(matmul_dtype if (cast_x_to_bf16 and not skip)
                           else x.dtype).itemsize
    bm = _round_up(min(block_m, _round_up(B, 16)), 16)   # 16: bf16 sublane pack
    while bm > 16 and _vmem_estimate_bytes(
            bm, tn, d_in_p, H, x_itemsize, jnp.dtype(out_dtype).itemsize,
            jnp.dtype(matmul_dtype).itemsize) > vmem_limit:
        bm = max(16, _round_up(bm // 2, 16))

    B_p = _round_up(B, bm)
    x_p = x
    if (B_p, d_in_p) != x.shape:
        x_p = jnp.pad(x, ((0, B_p - B), (0, d_in_p - d_in)))
    if cast_x_to_bf16 and not skip:
        # Halves the per-step x DMA bytes; kept f32 when skip=True so the
        # residual add stays full precision.
        x_p = x_p.astype(matmul_dtype)

    kernel = functools.partial(
        _solu_mlp_kernel,
        temperature=float(temperature),
        alpha=float(alpha),
        use_norm=bool(norm),
        use_skip=bool(skip),
        use_pre_gelu=bool(pre_gelu),
        approx_gelu=bool(approx_gelu),
    )

    grid = (B_p // bm, d_out_p // tn)

    def run(single_buffer_weights):
        # Grid-invariant operands only need one VMEM buffer (their index_map is
        # constant), halving the resident-weight footprint.
        inv = ({"pipeline_mode": pl.Buffered(1)} if single_buffer_weights
               else {})
        inv_n = inv if grid[1] == 1 else {}   # w2/b2 vary with j when N-tiled
        in_specs = [
            pl.BlockSpec((bm, d_in_p), lambda i, j: (i, 0)),         # x tile
            pl.BlockSpec((d_in_p, H), lambda i, j: (0, 0), **inv),   # w1 (bf16)
            pl.BlockSpec((1, H), lambda i, j: (0, 0), **inv),        # b1
            pl.BlockSpec((1, H), lambda i, j: (0, 0), **inv),        # gamma
            pl.BlockSpec((1, H), lambda i, j: (0, 0), **inv),        # beta
            pl.BlockSpec((H, tn), lambda i, j: (0, j), **inv_n),     # w2 tile
            pl.BlockSpec((1, tn), lambda i, j: (0, j), **inv_n),     # b2 tile
        ]
        return pl.pallas_call(
            kernel,
            out_shape=jax.ShapeDtypeStruct((B_p, d_out_p), out_dtype),
            grid_spec=pltpu.PrefetchScalarGridSpec(
                num_scalar_prefetch=0,
                grid=grid,
                in_specs=in_specs,
                out_specs=pl.BlockSpec((bm, tn), lambda i, j: (i, j)),
                scratch_shapes=[pltpu.VMEM((bm, H), matmul_dtype)],
            ),
            compiler_params=pltpu.CompilerParams(
                # Batch tiles shard across TensorCores; the output-tile axis is
                # "arbitrary" because the activation scratch carries across it.
                dimension_semantics=("parallel", "arbitrary"),
                vmem_limit_bytes=vmem_limit,
            ),
        )(x_p, w1, b1, gamma, beta, w2, b2)

    try:
        out = run(True)
    except Exception:
        # pipeline_mode=pl.Buffered(1) unsupported on this jax/libtpu combo;
        # fall back to default double-buffering (correct, more weight VMEM).
        out = run(False)

    # Strip batch / lane padding.
    return out[:B, :d_out]


def init_params(key, input_size, hidden_size, output_size, dtype=jnp.float32):
    """nn.Linear-style init (uniform +-1/sqrt(fan_in)); nn.LayerNorm defaults.
    Weights stored pre-transposed as (in_features, out_features)."""
    k1, k2, k3, k4 = jax.random.split(key, 4)
    bound1 = 1.0 / jnp.sqrt(input_size)
    bound2 = 1.0 / jnp.sqrt(hidden_size)
    return {
        "w1": jax.random.uniform(k1, (input_size, hidden_size), dtype,
                                 minval=-bound1, maxval=bound1),
        "b1": jax.random.uniform(k2, (1, hidden_size), dtype,
                                 minval=-bound1, maxval=bound1),
        "gamma": jnp.ones((1, hidden_size), dtype),
        "beta": jnp.zeros((1, hidden_size), dtype),
        "w2": jax.random.uniform(k3, (hidden_size, output_size), dtype,
                                 minval=-bound2, maxval=bound2),
        "b2": jax.random.uniform(k4, (1, output_size), dtype,
                                 minval=-bound2, maxval=bound2),
    }


def solu_mlp_reference(x, params, *, temperature=1.0, alpha=1.0, norm=True,
                       skip=False, pre_gelu=False, approx_gelu=False,
                       matmul_dtype=jnp.bfloat16):
    """Pure-JAX reference matching the PyTorch module, mirroring the kernel's
    bf16 matmul operands (f32 accumulation) for an apples-to-apples check."""
    w1 = params["w1"].astype(matmul_dtype)
    w2 = params["w2"].astype(matmul_dtype)
    h = jnp.dot(x.astype(matmul_dtype), w1,
                preferred_element_type=jnp.float32) + params["b1"]
    if pre_gelu:
        h = jax.nn.gelu(h, approximate=approx_gelu)
    solu = h * jax.nn.softmax(h * (1.0 / temperature), axis=-1)
    gelu = jax.nn.gelu(h, approximate=approx_gelu)
    h = (1.0 - alpha) * gelu + alpha * solu
    if norm:
        mean = jnp.mean(h, axis=-1, keepdims=True)
        var = jnp.mean(jnp.square(h - mean), axis=-1, keepdims=True)
        h = (h - mean) / jnp.sqrt(var + 1e-5)
        h = h * params["gamma"] + params["beta"]
    out = jnp.dot(h.astype(matmul_dtype), w2,
                  preferred_element_type=jnp.float32) + params["b2"]
    if skip:
        out = out + x
    return out.astype(x.dtype)


# TODO(synk): the module's `return_activations=True` mode (returning fc1+SoLU
# activations only) is not wired into this fused kernel; only the full forward
# pass is implemented.


if __name__ == "__main__":
    # Small shapes consistent with the module: batch of tokens, MLP dims.
    # hidden_size is a multiple of 128 so every activation vreg is unmasked.
    batch = 16
    input_size = 64
    hidden_size = 256
    output_size = 64

    key = jax.random.PRNGKey(0)
    k_x, k_p = jax.random.split(key)
    x = jax.random.normal(k_x, (batch, input_size), jnp.float32)
    params = init_params(k_p, input_size, hidden_size, output_size)
    prepared = prepare_params(params)   # lane-pad + bf16-cast weights ONCE

    # Case 1: default SoLU MLP (alpha=1, LayerNorm on).
    out = solu_mlp_forward(x, prepared, temperature=1.0, alpha=1.0,
                           norm=True, skip=False)
    out = jax.block_until_ready(out)
    ref = solu_mlp_reference(x, params, temperature=1.0, alpha=1.0,
                             norm=True, skip=False)
    assert out.shape == (batch, output_size)
    # bf16 MXU operands + approx reciprocal => slightly looser tolerance.
    assert jnp.allclose(out, ref, atol=2e-2, rtol=2e-2), "case 1 mismatch"

    # Case 2: GELU/SoLU blend + skip connection (exercises the blend path).
    out2 = solu_mlp_forward(x, prepared, temperature=2.0, alpha=0.5,
                            norm=True, skip=True)
    out2 = jax.block_until_ready(out2)
    ref2 = solu_mlp_reference(x, params, temperature=2.0, alpha=0.5,
                              norm=True, skip=True)
    assert out2.shape == (batch, output_size)
    assert jnp.allclose(out2, ref2, atol=2e-2, rtol=2e-2), "case 2 mismatch"

    print("KERNEL_OK")
</pallas_src>

<mosaic_0001>
module attributes {stable_mosaic.version = 11 : i64} {
  func.func @_solu_mlp_kernel(%arg0: i32, %arg1: i32, %arg2: memref<16x128xf32, #tpu.memory_space<vmem>>, %arg3: memref<128x256xbf16, #tpu.memory_space<vmem>>, %arg4: memref<1x256xf32, #tpu.memory_space<vmem>>, %arg5: memref<1x256xf32, #tpu.memory_space<vmem>>, %arg6: memref<1x256xf32, #tpu.memory_space<vmem>>, %arg7: memref<256x128xbf16, #tpu.memory_space<vmem>>, %arg8: memref<1x128xf32, #tpu.memory_space<vmem>>, %arg9: memref<16x128xf32, #tpu.memory_space<vmem>>, %arg10: memref<16x256xbf16, #tpu.memory_space<vmem>>) attributes {dimension_semantics = [#tpu.dimension_semantics<parallel>, #tpu.dimension_semantics<arbitrary>], iteration_bounds = array<i64: 1, 1>, scalar_prefetch = 0 : i64, scratch_operands = 1 : i64, tpu.core_type = #tpu.core_type<tc>, window_params = [{transform_indices = @transform_0, window_bounds = array<i64: 16, 128>}, {pipeline_mode = #tpu.pipeline_mode<synchronous>, transform_indices = @transform_1, window_bounds = array<i64: 128, 256>}, {pipeline_mode = #tpu.pipeline_mode<synchronous>, transform_indices = @transform_2, window_bounds = array<i64: 1, 256>}, {pipeline_mode = #tpu.pipeline_mode<synchronous>, transform_indices = @transform_3, window_bounds = array<i64: 1, 256>}, {pipeline_mode = #tpu.pipeline_mode<synchronous>, transform_indices = @transform_4, window_bounds = array<i64: 1, 256>}, {pipeline_mode = #tpu.pipeline_mode<synchronous>, transform_indices = @transform_5, window_bounds = array<i64: 256, 128>}, {pipeline_mode = #tpu.pipeline_mode<synchronous>, transform_indices = @transform_6, window_bounds = array<i64: 1, 128>}, {transform_indices = @transform_7, window_bounds = array<i64: 16, 128>}]} {
    %c0_i32 = arith.constant 0 : i32
    %0 = arith.cmpi eq, %arg1, %c0_i32 : i32
    %1 = arith.extui %0 : i1 to i32
    %c0_i32_0 = arith.constant 0 : i32
    %2 = arith.cmpi ne, %1, %c0_i32_0 : i32
    scf.if %2 {
      %c0_8 = arith.constant 0 : index
      %c0_9 = arith.constant 0 : index
      %10 = vector.load %arg2[%c0_8, %c0_9] : memref<16x128xf32, #tpu.memory_space<vmem>>, vector<16x128xf32>
      %11 = arith.truncf %10 : vector<16x128xf32> to vector<16x128xbf16>
      %c0_10 = arith.constant 0 : index
      %c0_11 = arith.constant 0 : index
      %12 = vector.load %arg3[%c0_10, %c0_11] : memref<128x256xbf16, #tpu.memory_space<vmem>>, vector<128x256xbf16>
      %cst_12 = arith.constant dense<0.000000e+00> : vector<16x256xf32>
      %13 = tpu.matmul %11, %12, %cst_12 {dimension_numbers = #tpu.dot_dimension_numbers<[1], [0], [0], [1], [0, 0, 1, 1], [], []>} : vector<16x128xbf16>, vector<128x256xbf16>, vector<16x256xf32> -> vector<16x256xf32>
      %c0_13 = arith.constant 0 : index
      %c0_14 = arith.constant 0 : index
      %14 = vector.load %arg4[%c0_13, %c0_14] : memref<1x256xf32, #tpu.memory_space<vmem>>, vector<1x256xf32>
      %15 = vector.broadcast %14 : vector<1x256xf32> to vector<16x256xf32>
      %16 = arith.addf %13, %15 : vector<16x256xf32>
      %cst_15 = arith.constant 1.000000e+00 : f32
      %17 = vector.broadcast %cst_15 : f32 to vector<16x256xf32>
      %18 = arith.mulf %16, %17 : vector<16x256xf32>
      %cst_16 = arith.constant dense<0xFF800000> : vector<16xf32>
      %19 = vector.multi_reduction <maximumf>, %18, %cst_16 [1] : vector<16x256xf32> to vector<16xf32>
      %20 = vector.shape_cast %19 : vector<16xf32> to vector<16x1xf32>
      %21 = vector.broadcast %20 : vector<16x1xf32> to vector<16x256xf32>
      %22 = arith.subf %18, %21 : vector<16x256xf32>
      %23 = math.exp %22 : vector<16x256xf32>
      %cst_17 = arith.constant dense<0.000000e+00> : vector<16xf32>
      %24 = vector.multi_reduction <add>, %23, %cst_17 [1] : vector<16x256xf32> to vector<16xf32>
      %25 = vector.shape_cast %24 : vector<16xf32> to vector<16x1xf32>
      %26 = tpu.reciprocal %25 {approx = true} : vector<16x1xf32> -> vector<16x1xf32>
      %27 = vector.broadcast %26 : vector<16x1xf32> to vector<16x256xf32>
      %28 = arith.mulf %23, %27 : vector<16x256xf32>
      %29 = arith.mulf %16, %28 : vector<16x256xf32>
      %cst_18 = arith.constant dense<0.000000e+00> : vector<16xf32>
      %30 = vector.multi_reduction <add>, %29, %cst_18 [1] : vector<16x256xf32> to vector<16xf32>
      %31 = vector.shape_cast %30 : vector<16xf32> to vector<16x1xf32>
      %cst_19 = arith.constant 3.906250e-03 : f32
      %32 = vector.broadcast %cst_19 : f32 to vector<16x1xf32>
      %33 = arith.mulf %31, %32 : vector<16x1xf32>
      %34 = arith.mulf %29, %29 : vector<16x256xf32>
      %cst_20 = arith.constant dense<0.000000e+00> : vector<16xf32>
      %35 = vector.multi_reduction <add>, %34, %cst_20 [1] : vector<16x256xf32> to vector<16xf32>
      %36 = vector.shape_cast %35 : vector<16xf32> to vector<16x1xf32>
      %cst_21 = arith.constant 3.906250e-03 : f32
      %37 = vector.broadcast %cst_21 : f32 to vector<16x1xf32>
      %38 = arith.mulf %36, %37 : vector<16x1xf32>
      %39 = arith.mulf %33, %33 : vector<16x1xf32>
      %40 = arith.subf %38, %39 : vector<16x1xf32>
      %41 = vector.broadcast %33 : vector<16x1xf32> to vector<16x256xf32>
      %42 = arith.subf %29, %41 : vector<16x256xf32>
      %cst_22 = arith.constant 9.99999974E-6 : f32
      %43 = vector.broadcast %cst_22 : f32 to vector<16x1xf32>
      %44 = arith.addf %40, %43 : vector<16x1xf32>
      %45 = math.rsqrt %44 : vector<16x1xf32>
      %46 = vector.broadcast %45 : vector<16x1xf32> to vector<16x256xf32>
      %47 = arith.mulf %42, %46 : vector<16x256xf32>
      %c0_23 = arith.constant 0 : index
      %c0_24 = arith.constant 0 : index
      %48 = vector.load %arg5[%c0_23, %c0_24] : memref<1x256xf32, #tpu.memory_space<vmem>>, vector<1x256xf32>
      %49 = vector.broadcast %48 : vector<1x256xf32> to vector<16x256xf32>
      %50 = arith.mulf %47, %49 : vector<16x256xf32>
      %c0_25 = arith.constant 0 : index
      %c0_26 = arith.constant 0 : index
      %51 = vector.load %arg6[%c0_25, %c0_26] : memref<1x256xf32, #tpu.memory_space<vmem>>, vector<1x256xf32>
      %52 = vector.broadcast %51 : vector<1x256xf32> to vector<16x256xf32>
      %53 = arith.addf %50, %52 : vector<16x256xf32>
      %54 = arith.truncf %53 : vector<16x256xf32> to vector<16x256xbf16>
      %c0_27 = arith.constant 0 : index
      %c0_28 = arith.constant 0 : index
      %55 = vector.load %arg10[%c0_27, %c0_28] : memref<16x256xbf16, #tpu.memory_space<vmem>>, vector<16x256xbf16>
      tpu.vector_store %arg10[%c0_27, %c0_28], %54 {strides = array<i32>} : memref<16x256xbf16, #tpu.memory_space<vmem>>, vector<16x256xbf16>,
    } else {
    }
    %c0 = arith.constant 0 : index
    %c0_1 = arith.constant 0 : index
    %3 = vector.load %arg10[%c0, %c0_1] : memref<16x256xbf16, #tpu.memory_space<vmem>>, vector<16x256xbf16>
    %c0_2 = arith.constant 0 : index
    %c0_3 = arith.constant 0 : index
    %4 = vector.load %arg7[%c0_2, %c0_3] : memref<256x128xbf16, #tpu.memory_space<vmem>>, vector<256x128xbf16>
    %cst = arith.constant dense<0.000000e+00> : vector<16x128xf32>
    %5 = tpu.matmul %3, %4, %cst {dimension_numbers = #tpu.dot_dimension_numbers<[1], [0], [0], [1], [0, 0, 1, 1], [], []>} : vector<16x256xbf16>, vector<256x128xbf16>, vector<16x128xf32> -> vector<16x128xf32>
    %c0_4 = arith.constant 0 : index
    %c0_5 = arith.constant 0 : index
    %6 = vector.load %arg8[%c0_4, %c0_5] : memref<1x128xf32, #tpu.memory_space<vmem>>, vector<1x128xf32>
    %7 = vector.broadcast %6 : vector<1x128xf32> to vector<16x128xf32>
    %8 = arith.addf %5, %7 : vector<16x128xf32>
    %c0_6 = arith.constant 0 : index
    %c0_7 = arith.constant 0 : index
    %9 = vector.load %arg9[%c0_6, %c0_7] : memref<16x128xf32, #tpu.memory_space<vmem>>, vector<16x128xf32>
    tpu.vector_store %arg9[%c0_6, %c0_7], %8 {strides = array<i32>} : memref<16x128xf32, #tpu.memory_space<vmem>>, vector<16x128xf32>,
    return
  }
  func.func @transform_0(%arg0: i32, %arg1: i32) -> (i32, i32) {
    %c0_i32 = arith.constant 0 : i32
    %c0_i32_0 = arith.constant 0 : i32
    return %arg0, %c0_i32 : i32, i32
  }
  func.func @transform_1(%arg0: i32, %arg1: i32) -> (i32, i32) {
    %c0_i32 = arith.constant 0 : i32
    %c0_i32_0 = arith.constant 0 : i32
    %c0_i32_1 = arith.constant 0 : i32
    return %c0_i32, %c0_i32_0 : i32, i32
  }
  func.func @transform_2(%arg0: i32, %arg1: i32) -> (i32, i32) {
    %c0_i32 = arith.constant 0 : i32
    %c0_i32_0 = arith.constant 0 : i32
    %c0_i32_1 = arith.constant 0 : i32
    return %c0_i32, %c0_i32_0 : i32, i32
  }
  func.func @transform_3(%arg0: i32, %arg1: i32) -> (i32, i32) {
    %c0_i32 = arith.constant 0 : i32
    %c0_i32_0 = arith.constant 0 : i32
    %c0_i32_1 = arith.constant 0 : i32
    return %c0_i32, %c0_i32_0 : i32, i32
  }
  func.func @transform_4(%arg0: i32, %arg1: i32) -> (i32, i32) {
    %c0_i32 = arith.constant 0 : i32
    %c0_i32_0 = arith.constant 0 : i32
    %c0_i32_1 = arith.constant 0 : i32
    return %c0_i32, %c0_i32_0 : i32, i32
  }
  func.func @transform_5(%arg0: i32, %arg1: i32) -> (i32, i32) {
    %c0_i32 = arith.constant 0 : i32
    %c0_i32_0 = arith.constant 0 : i32
    return %c0_i32, %arg1 : i32, i32
  }
  func.func @transform_6(%arg0: i32, %arg1: i32) -> (i32, i32) {
    %c0_i32 = arith.constant 0 : i32
    %c0_i32_0 = arith.constant 0 : i32
    return %c0_i32, %arg1 : i32, i32
  }
  func.func @transform_7(%arg0: i32, %arg1: i32) -> (i32, i32) {
    %c0_i32 = arith.constant 0 : i32
    return %arg0, %arg1 : i32, i32
  }
}

module attributes {stable_mosaic.version = 11 : i64} {
  func.func @_solu_mlp_kernel(%arg0: i32, %arg1: i32, %arg2: memref<16x128xf32, #tpu.memory_space<vmem>>, %arg3: memref<128x256xbf16, #tpu.memory_space<vmem>>, %arg4: memref<1x256xf32, #tpu.memory_space<vmem>>, %arg5: memref<1x256xf32, #tpu.memory_space<vmem>>, %arg6: memref<1x256xf32, #tpu.memory_space<vmem>>, %arg7: memref<256x128xbf16, #tpu.memory_space<vmem>>, %arg8: memref<1x128xf32, #tpu.memory_space<vmem>>, %arg9: memref<16x128xf32, #tpu.memory_space<vmem>>, %arg10: memref<16x256xbf16, #tpu.memory_space<vmem>>) attributes {dimension_semantics = [#tpu.dimension_semantics<parallel>, #tpu.dimension_semantics<arbitrary>], iteration_bounds = array<i64: 1, 1>, scalar_prefetch = 0 : i64, scratch_operands = 1 : i64, tpu.core_type = #tpu.core_type<tc>, window_params = [{transform_indices = @transform_0, window_bounds = array<i64: 16, 128>}, {pipeline_mode = #tpu.pipeline_mode<synchronous>, transform_indices = @transform_1, window_bounds = array<i64: 128, 256>}, {pipeline_mode = #tpu.pipeline_mode<synchronous>, transform_indices = @transform_2, window_bounds = array<i64: 1, 256>}, {pipeline_mode = #tpu.pipeline_mode<synchronous>, transform_indices = @transform_3, window_bounds = array<i64: 1, 256>}, {pipeline_mode = #tpu.pipeline_mode<synchronous>, transform_indices = @transform_4, window_bounds = array<i64: 1, 256>}, {transform_indices = @transform_5, window_bounds = array<i64: 256, 128>}, {transform_indices = @transform_6, window_bounds = array<i64: 1, 128>}, {transform_indices = @transform_7, window_bounds = array<i64: 16, 128>}]} {
    %c0_i32 = arith.constant 0 : i32
    %0 = arith.cmpi eq, %arg1, %c0_i32 : i32
    %1 = arith.extui %0 : i1 to i32
    %c0_i32_0 = arith.constant 0 : i32
    %2 = arith.cmpi ne, %1, %c0_i32_0 : i32
    scf.if %2 {
      %c0_8 = arith.constant 0 : index
      %c0_9 = arith.constant 0 : index
      %10 = vector.load %arg2[%c0_8, %c0_9] : memref<16x128xf32, #tpu.memory_space<vmem>>, vector<16x128xf32>
      %11 = arith.truncf %10 : vector<16x128xf32> to vector<16x128xbf16>
      %c0_10 = arith.constant 0 : index
      %c0_11 = arith.constant 0 : index
      %12 = vector.load %arg3[%c0_10, %c0_11] : memref<128x256xbf16, #tpu.memory_space<vmem>>, vector<128x256xbf16>
      %cst_12 = arith.constant dense<0.000000e+00> : vector<16x256xf32>
      %13 = tpu.matmul %11, %12, %cst_12 {dimension_numbers = #tpu.dot_dimension_numbers<[1], [0], [0], [1], [0, 0, 1, 1], [], []>} : vector<16x128xbf16>, vector<128x256xbf16>, vector<16x256xf32> -> vector<16x256xf32>
      %c0_13 = arith.constant 0 : index
      %c0_14 = arith.constant 0 : index
      %14 = vector.load %arg4[%c0_13, %c0_14] : memref<1x256xf32, #tpu.memory_space<vmem>>, vector<1x256xf32>
      %15 = vector.broadcast %14 : vector<1x256xf32> to vector<16x256xf32>
      %16 = arith.addf %13, %15 : vector<16x256xf32>
      %cst_15 = arith.constant 1.000000e+00 : f32
      %17 = vector.broadcast %cst_15 : f32 to vector<16x256xf32>
      %18 = arith.mulf %16, %17 : vector<16x256xf32>
      %cst_16 = arith.constant dense<0xFF800000> : vector<16xf32>
      %19 = vector.multi_reduction <maximumf>, %18, %cst_16 [1] : vector<16x256xf32> to vector<16xf32>
      %20 = vector.shape_cast %19 : vector<16xf32> to vector<16x1xf32>
      %21 = vector.broadcast %20 : vector<16x1xf32> to vector<16x256xf32>
      %22 = arith.subf %18, %21 : vector<16x256xf32>
      %23 = math.exp %22 : vector<16x256xf32>
      %cst_17 = arith.constant dense<0.000000e+00> : vector<16xf32>
      %24 = vector.multi_reduction <add>, %23, %cst_17 [1] : vector<16x256xf32> to vector<16xf32>
      %25 = vector.shape_cast %24 : vector<16xf32> to vector<16x1xf32>
      %26 = tpu.reciprocal %25 {approx = true} : vector<16x1xf32> -> vector<16x1xf32>
      %27 = vector.broadcast %26 : vector<16x1xf32> to vector<16x256xf32>
      %28 = arith.mulf %23, %27 : vector<16x256xf32>
      %29 = arith.mulf %16, %28 : vector<16x256xf32>
      %cst_18 = arith.constant dense<0.000000e+00> : vector<16xf32>
      %30 = vector.multi_reduction <add>, %29, %cst_18 [1] : vector<16x256xf32> to vector<16xf32>
      %31 = vector.shape_cast %30 : vector<16xf32> to vector<16x1xf32>
      %cst_19 = arith.constant 3.906250e-03 : f32
      %32 = vector.broadcast %cst_19 : f32 to vector<16x1xf32>
      %33 = arith.mulf %31, %32 : vector<16x1xf32>
      %34 = arith.mulf %29, %29 : vector<16x256xf32>
      %cst_20 = arith.constant dense<0.000000e+00> : vector<16xf32>
      %35 = vector.multi_reduction <add>, %34, %cst_20 [1] : vector<16x256xf32> to vector<16xf32>
      %36 = vector.shape_cast %35 : vector<16xf32> to vector<16x1xf32>
      %cst_21 = arith.constant 3.906250e-03 : f32
      %37 = vector.broadcast %cst_21 : f32 to vector<16x1xf32>
      %38 = arith.mulf %36, %37 : vector<16x1xf32>
      %39 = arith.mulf %33, %33 : vector<16x1xf32>
      %40 = arith.subf %38, %39 : vector<16x1xf32>
      %41 = vector.broadcast %33 : vector<16x1xf32> to vector<16x256xf32>
      %42 = arith.subf %29, %41 : vector<16x256xf32>
      %cst_22 = arith.constant 9.99999974E-6 : f32
      %43 = vector.broadcast %cst_22 : f32 to vector<16x1xf32>
      %44 = arith.addf %40, %43 : vector<16x1xf32>
      %45 = math.rsqrt %44 : vector<16x1xf32>
      %46 = vector.broadcast %45 : vector<16x1xf32> to vector<16x256xf32>
      %47 = arith.mulf %42, %46 : vector<16x256xf32>
      %c0_23 = arith.constant 0 : index
      %c0_24 = arith.constant 0 : index
      %48 = vector.load %arg5[%c0_23, %c0_24] : memref<1x256xf32, #tpu.memory_space<vmem>>, vector<1x256xf32>
      %49 = vector.broadcast %48 : vector<1x256xf32> to vector<16x256xf32>
      %50 = arith.mulf %47, %49 : vector<16x256xf32>
      %c0_25 = arith.constant 0 : index
      %c0_26 = arith.constant 0 : index
      %51 = vector.load %arg6[%c0_25, %c0_26] : memref<1x256xf32, #tpu.memory_space<vmem>>, vector<1x256xf32>
      %52 = vector.broadcast %51 : vector<1x256xf32> to vector<16x256xf32>
      %53 = arith.addf %50, %52 : vector<16x256xf32>
      %54 = arith.truncf %53 : vector<16x256xf32> to vector<16x256xbf16>
      %c0_27 = arith.constant 0 : index
      %c0_28 = arith.constant 0 : index
      %55 = vector.load %arg10[%c0_27, %c0_28] : memref<16x256xbf16, #tpu.memory_space<vmem>>, vector<16x256xbf16>
      tpu.vector_store %arg10[%c0_27, %c0_28], %54 {strides = array<i32>} : memref<16x256xbf16, #tpu.memory_space<vmem>>, vector<16x256xbf16>,
    } else {
    }
    %c0 = arith.constant 0 : index
    %c0_1 = arith.constant 0 : index
    %3 = vector.load %arg10[%c0, %c0_1] : memref<16x256xbf16, #tpu.memory_space<vmem>>, vector<16x256xbf16>
    %c0_2 = arith.constant 0 : index
    %c0_3 = arith.constant 0 : index
    %4 = vector.load %arg7[%c0_2, %c0_3] : memref<256x128xbf16, #tpu.memory_space<vmem>>, vector<256x128xbf16>
    %cst = arith.constant dense<0.000000e+00> : vector<16x128xf32>
    %5 = tpu.matmul %3, %4, %cst {dimension_numbers = #tpu.dot_dimension_numbers<[1], [0], [0], [1], [0, 0, 1, 1], [], []>} : vector<16x256xbf16>, vector<256x128xbf16>, vector<16x128xf32> -> vector<16x128xf32>
    %c0_4 = arith.constant 0 : index
    %c0_5 = arith.constant 0 : index
    %6 = vector.load %arg8[%c0_4, %c0_5] : memref<1x128xf32, #tpu.memory_space<vmem>>, vector<1x128xf32>
    %7 = vector.broadcast %6 : vector<1x128xf32> to vector<16x128xf32>
    %8 = arith.addf %5, %7 : vector<16x128xf32>
    %c0_6 = arith.constant 0 : index
    %c0_7 = arith.constant 0 : index
    %9 = vector.load %arg9[%c0_6, %c0_7] : memref<16x128xf32, #tpu.memory_space<vmem>>, vector<16x128xf32>
    tpu.vector_store %arg9[%c0_6, %c0_7], %8 {strides = array<i32>} : memref<16x128xf32, #tpu.memory_space<vmem>>, vector<16x128xf32>,
    return
  }
  func.func @transform_0(%arg0: i32, %arg1: i32) -> (i32, i32) {
    %c0_i32 = arith.constant 0 : i32
    %c0_i32_0 = arith.constant 0 : i32
    return %arg0, %c0_i32 : i32, i32
  }
  func.func @transform_1(%arg0: i32, %arg1: i32) -> (i32, i32) {
    %c0_i32 = arith.constant 0 : i32
    %c0_i32_0 = arith.constant 0 : i32
    %c0_i32_1 = arith.constant 0 : i32
    return %c0_i32, %c0_i32_0 : i32, i32
  }
  func.func @transform_2(%arg0: i32, %arg1: i32) -> (i32, i32) {
    %c0_i32 = arith.constant 0 : i32
    %c0_i32_0 = arith.constant 0 : i32
    %c0_i32_1 = arith.constant 0 : i32
    return %c0_i32, %c0_i32_0 : i32, i32
  }
  func.func @transform_3(%arg0: i32, %arg1: i32) -> (i32, i32) {
    %c0_i32 = arith.constant 0 : i32
    %c0_i32_0 = arith.constant 0 : i32
    %c0_i32_1 = arith.constant 0 : i32
    return %c0_i32, %c0_i32_0 : i32, i32
  }
  func.func @transform_4(%arg0: i32, %arg1: i32) -> (i32, i32) {
    %c0_i32 = arith.constant 0 : i32
    %c0_i32_0 = arith.constant 0 : i32
    %c0_i32_1 = arith.constant 0 : i32
    return %c0_i32, %c0_i32_0 : i32, i32
  }
  func.func @transform_5(%arg0: i32, %arg1: i32) -> (i32, i32) {
    %c0_i32 = arith.constant 0 : i32
    %c0_i32_0 = arith.constant 0 : i32
    return %c0_i32, %arg1 : i32, i32
  }
  func.func @transform_6(%arg0: i32, %arg1: i32) -> (i32, i32) {
    %c0_i32 = arith.constant 0 : i32
    %c0_i32_0 = arith.constant 0 : i32
    return %c0_i32, %arg1 : i32, i32
  }
  func.func @transform_7(%arg0: i32, %arg1: i32) -> (i32, i32) {
    %c0_i32 = arith.constant 0 : i32
    return %arg0, %arg1 : i32, i32
  }
}

</mosaic_0001>

<llo_original>
// kernel: tpu_custom_call.1
$region0: #{tpu_custom_call.1}
  #allocation0 [shape = 'u32[]', space=smem, size = 0x4, offset = 0x4, fixed_abs, tag = 'smem constant byte address 0x4 - core index']
  #allocation1 [shape = 'u32[144,128]{1,0:T(1,128)}', space=vmem, size = 0x12000, scoped, tag = 'internal scratch']
  #allocation2 [shape = 'bf16[16,256]{1,0:T(16,128)(2,1)}', space=vmem, size = 0x2000, scoped, tag = 'scratch operand']
  %s0 = inlined_call_operand.hbm [shape: f32[16,128], index: 0, kind: input, shape index: {}]
  %s1 = inlined_call_operand.hbm [shape: bf16[128,256], index: 1, kind: input, shape index: {}]
  %s2 = inlined_call_operand.vmem [shape: f32[1,256], index: 2, kind: input, shape index: {}]
  %s3 = inlined_call_operand.vmem [shape: f32[1,256], index: 3, kind: input, shape index: {}]
  %s4 = inlined_call_operand.vmem [shape: f32[1,256], index: 4, kind: input, shape index: {}]
  %s5 = inlined_call_operand.hbm [shape: bf16[256,128], index: 5, kind: input, shape index: {}]
  %s6 = inlined_call_operand.vmem [shape: f32[1,128], index: 6, kind: input, shape index: {}]
  %s7 = inlined_call_operand.hbm [shape: f32[16,128], index: 7, kind: output, shape index: {}]
  %s8 = sld [smem:[#allocation0]]
  $region54: #{tpu_custom_call.1} parent=0
    _
  %s10 = ssub.s32 1, %s8
  %s11 = scalar_select 0, %s10, %s8
  $region1: #{tpu_custom_call.1} parent=0
    #allocation3 [shape = 'u8[8192]{0}', space=vmem, size = 0x2000, scoped, tag = 'input window, operand 0, single buffered']
    #allocation4 [shape = 's32[1]{0}', space=sflag, size = 0x4, scoped, tag = 'scoped memory for tpu_custom_call.1']
    #allocation5 [shape = 's32[1]{0}', space=sflag, size = 0x4, scoped, tag = 'scoped memory for tpu_custom_call.1']
    #allocation6 [shape = 'u8[65536]{0}', space=vmem, size = 0x10000, scoped, tag = 'input window, operand 1, single buffered']
    #allocation7 [shape = 's32[1]{0}', space=sflag, size = 0x4, scoped, tag = 'scoped memory for tpu_custom_call.1']
    #allocation8 [shape = 'u8[65536]{0}', space=vmem, size = 0x10000, scoped, tag = 'input window, operand 5, single buffered']
    #allocation9 [shape = 'u8[8192]{0}', space=vmem, size = 0x2000, scoped, tag = 'output window, operand 0, single buffered']
    %12 = vsyncpa [#allocation4], 0
    %13 = vsyncpa [#allocation7], 0
    %14 = vsyncpa [#allocation5], 0
    // Predicated region
    $region2: #{tpu_custom_call.1} parent=1 // pred_check
      _
    $region3: #{tpu_custom_call.1} parent=1 // pred_check_branch
      %16 = sbr.rel (0) target = $region5
    $region4: #{tpu_custom_call.1} parent=1 // pred_region
      %s18 = ssub.s32 256, 256
      %19 = vsyncadd [#allocation4], %s18
      %s20 = sshll.u32 [#allocation3], 4
      %s21 = int_to_ptr.vmem [resolvable:$true] %s20
      %26 = dma.hbm_to_vmem [thread:$0]  %s0, 256, %s21, [#allocation4], 128, 128, 8
    $region5: #{tpu_custom_call.1} parent=1 // pred_fallthru
      _
    // Predicated region
    $region6: #{tpu_custom_call.1} parent=1 // pred_check
      _
    $region7: #{tpu_custom_call.1} parent=1 // pred_check_branch
      %28 = sbr.rel (0) target = $region9
    $region8: #{tpu_custom_call.1} parent=1 // pred_region
      %s30 = ssub.s32 2048, 2048
      %31 = vsyncadd [#allocation7], %s30
      %s32 = sshll.u32 [#allocation6], 4
      %s33 = int_to_ptr.vmem [resolvable:$true] %s32
      %38 = dma.hbm_to_vmem [thread:$0]  %s1, 2048, %s33, [#allocation7], 128, 128, 8
    $region9: #{tpu_custom_call.1} parent=1 // pred_fallthru
      _
    // Predicated region
    $region10: #{tpu_custom_call.1} parent=1 // pred_check
      _
    $region11: #{tpu_custom_call.1} parent=1 // pred_check_branch
      %40 = sbr.rel (0) target = $region13
    $region12: #{tpu_custom_call.1} parent=1 // pred_region
      _
    $region13: #{tpu_custom_call.1} parent=1 // pred_fallthru
      _
    // Predicated region
    $region14: #{tpu_custom_call.1} parent=1 // pred_check
      _
    $region15: #{tpu_custom_call.1} parent=1 // pred_check_branch
      %42 = sbr.rel (0) target = $region17
    $region16: #{tpu_custom_call.1} parent=1 // pred_region
      _
    $region17: #{tpu_custom_call.1} parent=1 // pred_fallthru
      _
    // Predicated region
    $region18: #{tpu_custom_call.1} parent=1 // pred_check
      _
    $region19: #{tpu_custom_call.1} parent=1 // pred_check_branch
      %44 = sbr.rel (0) target = $region21
    $region20: #{tpu_custom_call.1} parent=1 // pred_region
      _
    $region21: #{tpu_custom_call.1} parent=1 // pred_fallthru
      _
    // Predicated region
    $region22: #{tpu_custom_call.1} parent=1 // pred_check
      _
    $region23: #{tpu_custom_call.1} parent=1 // pred_check_branch
      %46 = sbr.rel (0) target = $region25
    $region24: #{tpu_custom_call.1} parent=1 // pred_region
      %s48 = ssub.s32 2048, 2048
      %49 = vsyncadd [#allocation7], %s48
      %s50 = sshll.u32 [#allocation8], 4
      %s51 = int_to_ptr.vmem [resolvable:$true] %s50
      %56 = dma.hbm_to_vmem [thread:$0]  %s5, 2048, %s51, [#allocation7], 64, 64, 4
    $region25: #{tpu_custom_call.1} parent=1 // pred_fallthru
      _
    // Predicated region
    $region26: #{tpu_custom_call.1} parent=1 // pred_check
      _
    $region27: #{tpu_custom_call.1} parent=1 // pred_check_branch
      %58 = sbr.rel (0) target = $region29
    $region28: #{tpu_custom_call.1} parent=1 // pred_region
      _
    $region29: #{tpu_custom_call.1} parent=1 // pred_fallthru
      _
    // Predicated region
    $region30: #{tpu_custom_call.1} parent=1 // pred_check
      _
    $region31: #{tpu_custom_call.1} parent=1 // pred_check_branch
      %60 = sbr.rel (0) target = $region33
    $region32: #{tpu_custom_call.1} parent=1 // pred_region
      %61 = dma.done [#allocation4], 256
    $region33: #{tpu_custom_call.1} parent=1 // pred_fallthru
      _
    // Predicated region
    $region34: #{tpu_custom_call.1} parent=1 // pred_check
      _
    $region35: #{tpu_custom_call.1} parent=1 // pred_check_branch
      %63 = sbr.rel (0) target = $region37
    $region36: #{tpu_custom_call.1} parent=1 // pred_region
      %64 = dma.done [#allocation7], 2048
    $region37: #{tpu_custom_call.1} parent=1 // pred_fallthru
      _
    // Predicated region
    $region38: #{tpu_custom_call.1} parent=1 // pred_check
      _
    $region39: #{tpu_custom_call.1} parent=1 // pred_check_branch
      %66 = sbr.rel (0) target = $region41
    $region40: #{tpu_custom_call.1} parent=1 // pred_region
      %67 = dma.done [#allocation7], 2048
    $region41: #{tpu_custom_call.1} parent=1 // pred_fallthru
      _
    %p69 = scmp.eq.s32.totalorder 0, 0
    // Predicated region
    $region42: #{tpu_custom_call.1} parent=1 // pred_check
      %p70 = pneg %p69
    $region43: #{tpu_custom_call.1} parent=1 // pred_check_branch
      %72 = sbr.rel (%p70) target = $region45
    $region44: #{tpu_custom_call.1} parent=1 // pred_region
      %v73 = vld [vmem:[#allocation3] sm:$0xff]
      %v74 = vld [vmem:[#allocation3 + $0x8] sm:$0xff]
      %v75 = vpack.c.bf16 %v74, %v73
      %v76 = vld [vmem:[#allocation6] sm:$0xff]
      %v77 = vld [vmem:[#allocation6 + $0x8] sm:$0xff]
      %v78 = vld [vmem:[#allocation6 + $0x10] sm:$0xff]
      %v79 = vld [vmem:[#allocation6 + $0x18] sm:$0xff]
      %v80 = vld [vmem:[#allocation6 + $0x20] sm:$0xff]
      %v81 = vld [vmem:[#allocation6 + $0x28] sm:$0xff]
      %v82 = vld [vmem:[#allocation6 + $0x30] sm:$0xff]
      %v83 = vld [vmem:[#allocation6 + $0x38] sm:$0xff]
      %v84 = vld [vmem:[#allocation6 + $0x40] sm:$0xff]
      %v85 = vld [vmem:[#allocation6 + $0x48] sm:$0xff]
      %v86 = vld [vmem:[#allocation6 + $0x50] sm:$0xff]
      %v87 = vld [vmem:[#allocation6 + $0x58] sm:$0xff]
      %v88 = vld [vmem:[#allocation6 + $0x60] sm:$0xff]
      %v89 = vld [vmem:[#allocation6 + $0x68] sm:$0xff]
      %v90 = vld [vmem:[#allocation6 + $0x70] sm:$0xff]
      %v91 = vld [vmem:[#allocation6 + $0x78] sm:$0xff]
      %v92 = vld [vmem:[%s2] sm:$0x3]
      %v94 = vlaneseq
      %v95 = vshrl.u32 %v94, 7
      %v96 = vsub.s32 0, %v95
      %v97 = vrot.slane %v92, %v96
      %v98 = vlaneseq
      %v99 = vshrl.u32 %v98, 7
      %v100 = vsub.s32 1, %v99
      %v101 = vrot.slane %v92, %v100
      %v120 = vunpack.c.l.b16 %v76
      %v121 = vunpack.c.h.b16 %v76
      %v122 = vunpack.c.l.b16 %v77
      %v123 = vunpack.c.h.b16 %v77
      %v124 = vunpack.c.l.b16 %v78
      %v125 = vunpack.c.h.b16 %v78
      %v126 = vunpack.c.l.b16 %v79
      %v127 = vunpack.c.h.b16 %v79
      %v128 = vunpack.c.l.b16 %v80
      %v129 = vunpack.c.h.b16 %v80
      %v130 = vunpack.c.l.b16 %v81
      %v131 = vunpack.c.h.b16 %v81
      %v132 = vunpack.c.l.b16 %v82
      %v133 = vunpack.c.h.b16 %v82
      %v134 = vunpack.c.l.b16 %v83
      %v135 = vunpack.c.h.b16 %v83
      %v136 = vunpack.c.l.b16 %v84
      %v137 = vunpack.c.h.b16 %v84
      %v138 = vunpack.c.l.b16 %v85
      %v139 = vunpack.c.h.b16 %v85
      %v140 = vunpack.c.l.b16 %v86
      %v141 = vunpack.c.h.b16 %v86
      %v142 = vunpack.c.l.b16 %v87
      %v143 = vunpack.c.h.b16 %v87
      %v144 = vunpack.c.l.b16 %v88
      %v145 = vunpack.c.h.b16 %v88
      %v146 = vunpack.c.l.b16 %v89
      %v147 = vunpack.c.h.b16 %v89
      %v148 = vunpack.c.l.b16 %v90
      %v149 = vunpack.c.h.b16 %v90
      %v150 = vunpack.c.l.b16 %v91
      %v151 = vunpack.c.h.b16 %v91
      %v152 = vpack.c.b16 %v122, %v120
      %v153 = vpack.c.b16 %v123, %v121
      %v154 = vpack.c.b16 %v126, %v124
      %v155 = vpack.c.b16 %v127, %v125
      %v156 = vpack.c.b16 %v130, %v128
      %v157 = vpack.c.b16 %v131, %v129
      %v158 = vpack.c.b16 %v134, %v132
      %v159 = vpack.c.b16 %v135, %v133
      %v160 = vpack.c.b16 %v138, %v136
      %v161 = vpack.c.b16 %v139, %v137
      %v162 = vpack.c.b16 %v142, %v140
      %v163 = vpack.c.b16 %v143, %v141
      %v164 = vpack.c.b16 %v146, %v144
      %v165 = vpack.c.b16 %v147, %v145
      %v166 = vpack.c.b16 %v150, %v148
      %v167 = vpack.c.b16 %v151, %v149
      %184 = vmatprep.subr.bf16.mxu0 %v153
      %185 = vmatpush1.bf16.msra.mxu0 %v152
      %186 = vmatprep.subr.bf16.mxu0 %v155
      %187 = vmatpush1.bf16.msra.mxu0 %v154
      %188 = vmatprep.subr.bf16.mxu0 %v157
      %189 = vmatpush1.bf16.msra.mxu0 %v156
      %190 = vmatprep.subr.bf16.mxu0 %v159
      %191 = vmatpush1.bf16.msra.mxu0 %v158
      %192 = vmatprep.subr.bf16.mxu0 %v161
      %193 = vmatpush1.bf16.msra.mxu0 %v160
      %194 = vmatprep.subr.bf16.mxu0 %v163
      %195 = vmatpush1.bf16.msra.mxu0 %v162
      %196 = vmatprep.subr.bf16.mxu0 %v165
      %197 = vmatpush1.bf16.msra.mxu0 %v164
      %198 = vmatprep.subr.bf16.mxu0 %v167
      %199 = vmatpush1.bf16.msra.mxu0 %v166
      %200 = vmatprep.subr.bf16.mxu0 0
      %201 = vmatpush1.bf16.msra.mxu0 0
      %202 = vmatprep.subr.bf16.mxu0 0
      %203 = vmatpush1.bf16.msra.mxu0 0
      %204 = vmatprep.subr.bf16.mxu0 0
      %205 = vmatpush1.bf16.msra.mxu0 0
      %206 = vmatprep.subr.bf16.mxu0 0
      %207 = vmatpush1.bf16.msra.mxu0 0
      %208 = vmatprep.subr.bf16.mxu0 0
      %209 = vmatpush1.bf16.msra.mxu0 0
      %210 = vmatprep.subr.bf16.mxu0 0
      %211 = vmatpush1.bf16.msra.mxu0 0
      %212 = vmatprep.subr.bf16.mxu0 0
      %213 = vmatpush1.bf16.msra.mxu0 0
      %214 = vmatprep.subr.bf16.mxu0 0
      %215 = vmatpush1.bf16.msra.mxu0 0
      %216 = vmatprep.mubr.bf16.mxu0 0
      %217 = vmatmul.mubr.bf16.gmra.mrb[0].mxu0 %v75
      %v218 = vpop.f32.mrb[0].mxu0
      %v219 = vadd.f32 %v97, %v218
      %v220 = vpop.f32.mrb[0].mxu0
      %v221 = vadd.f32 %v101, %v220
      %v222 = vpop.f32.mrb[0].mxu0
      %v223 = vadd.f32 %v97, %v222
      %v224 = vpop.f32.mrb[0].mxu0
      %v225 = vadd.f32 %v101, %v224
      %226 = vdwg.mxu0
      %v227 = vmax.f32 %v219, %v221
      %228 = vmax.xlane.f32.xlu0 %v227
      %v229 = vpop.xlane.xlu0 %228
      %v230 = vmax.f32 %v223, %v225
      %231 = vmax.xlane.f32.xlu0 %v230
      %v232 = vpop.xlane.xlu0 %231
      %v233 = vsub.f32 %v219, %v229
      %v234 = vsub.f32 %v221, %v229
      %v235 = vsub.f32 %v223, %v232
      %v236 = vsub.f32 %v225, %v232
      %v237 = vmul.f32 %v233, 1.442695
      %v238 = vpow.pop %v237
      %v239 = vmul.f32 %v234, 1.442695
      %v240 = vpow.pop %v239
      %v241 = vmul.f32 %v235, 1.442695
      %v242 = vpow.pop %v241
      %v243 = vmul.f32 %v236, 1.442695
      %v244 = vpow.pop %v243
      %v245 = vadd.f32 %v238, %v240
      %246 = vadd.xlane.f32.xlu0 %v245
      %v247 = vpop.xlane.xlu0 %246
      %v248 = vadd.f32 %v242, %v244
      %249 = vadd.xlane.f32.xlu0 %v248
      %v250 = vpop.xlane.xlu0 %249
      %v251 = vrcp.pop %v247
      %v252 = vrcp.pop %v250
      %v253 = vmul.f32 %v238, %v251
      %v254 = vmul.f32 %v240, %v251
      %v255 = vmul.f32 %v242, %v252
      %v256 = vmul.f32 %v244, %v252
      %v257 = vmul.f32 %v219, %v253
      %v258 = vmul.f32 %v221, %v254
      %v259 = vmul.f32 %v223, %v255
      %v260 = vmul.f32 %v225, %v256
      %v261 = vadd.f32 %v257, %v258
      %262 = vadd.xlane.f32.xlu0 %v261
      %v263 = vpop.xlane.xlu0 %262
      %v264 = vadd.f32 %v259, %v260
      %265 = vadd.xlane.f32.xlu0 %v264
      %v266 = vpop.xlane.xlu0 %265
      %v267 = vmul.f32 %v263, 0.00390625
      %v268 = vmul.f32 %v266, 0.00390625
      %v269 = vmul.f32 %v257, %v257
      %v270 = vmul.f32 %v258, %v258
      %v271 = vmul.f32 %v259, %v259
      %v272 = vmul.f32 %v260, %v260
      %v273 = vadd.f32 %v269, %v270
      %274 = vadd.xlane.f32.xlu0 %v273
      %v275 = vpop.xlane.xlu0 %274
      %v276 = vadd.f32 %v271, %v272
      %277 = vadd.xlane.f32.xlu0 %v276
      %v278 = vpop.xlane.xlu0 %277
      %v279 = vmul.f32 %v275, 0.00390625
      %v280 = vmul.f32 %v278, 0.00390625
      %v281 = vmul.f32 %v267, %v267
      %v282 = vmul.f32 %v268, %v268
      %v283 = vsub.f32 %v279, %v281
      %v284 = vsub.f32 %v280, %v282
      %v285 = vsub.f32 %v257, %v267
      %v286 = vsub.f32 %v258, %v267
      %v287 = vsub.f32 %v259, %v268
      %v288 = vsub.f32 %v260, %v268
      %v289 = vadd.f32 %v283, 1e-05
      %v290 = vadd.f32 %v284, 1e-05
      %v291 = vrsqrt.pop %v289
      %v292 = vrsqrt.pop %v290
      %v293 = vmul.f32 %v285, %v291
      %v294 = vmul.f32 %v286, %v291
      %v295 = vmul.f32 %v287, %v292
      %v296 = vmul.f32 %v288, %v292
      %v297 = vld [vmem:[%s3] sm:$0x3]
      %v299 = vlaneseq
      %v300 = vshrl.u32 %v299, 7
      %v301 = vsub.s32 0, %v300
      %v302 = vrot.slane %v297, %v301
      %v303 = vlaneseq
      %v304 = vshrl.u32 %v303, 7
      %v305 = vsub.s32 1, %v304
      %v306 = vrot.slane %v297, %v305
      %v309 = vmul.f32 %v293, %v302
      %v310 = vmul.f32 %v294, %v306
      %v311 = vmul.f32 %v295, %v302
      %v312 = vmul.f32 %v296, %v306
      %v313 = vld [vmem:[%s4] sm:$0x3]
      %v315 = vlaneseq
      %v316 = vshrl.u32 %v315, 7
      %v317 = vsub.s32 0, %v316
      %v318 = vrot.slane %v313, %v317
      %v319 = vlaneseq
      %v320 = vshrl.u32 %v319, 7
      %v321 = vsub.s32 1, %v320
      %v322 = vrot.slane %v313, %v321
      %v325 = vadd.f32 %v309, %v318
      %v326 = vadd.f32 %v310, %v322
      %v327 = vadd.f32 %v311, %v318
      %v328 = vadd.f32 %v312, %v322
      %v329 = vpack.c.bf16 %v327, %v325
      %v330 = vpack.c.bf16 %v328, %v326
      %331 = vst [vmem:[#allocation2] sm:$0xff] %v329
      %332 = vst [vmem:[#allocation2 + $0x8] sm:$0xff] %v330
    $region45: #{tpu_custom_call.1} parent=1 // pred_fallthru
      _
    %v333 = vld [vmem:[#allocation2] sm:$0xff]
    %v334 = vld [vmem:[#allocation2 + $0x8] sm:$0xff]
    %v335 = vld [vmem:[#allocation8] sm:$0xf]
    %v336 = vld [vmem:[#allocation8 + $0x4] sm:$0xf]
    %v337 = vld [vmem:[#allocation8 + $0x8] sm:$0xf]
    %v338 = vld [vmem:[#allocation8 + $0xc] sm:$0xf]
    %v339 = vld [vmem:[#allocation8 + $0x10] sm:$0xf]
    %v340 = vld [vmem:[#allocation8 + $0x14] sm:$0xf]
    %v341 = vld [vmem:[#allocation8 + $0x18] sm:$0xf]
    %v342 = vld [vmem:[#allocation8 + $0x1c] sm:$0xf]
    %v343 = vld [vmem:[#allocation8 + $0x20] sm:$0xf]
    %v344 = vld [vmem:[#allocation8 + $0x24] sm:$0xf]
    %v345 = vld [vmem:[#allocation8 + $0x28] sm:$0xf]
    %v346 = vld [vmem:[#allocation8 + $0x2c] sm:$0xf]
    %v347 = vld [vmem:[#allocation8 + $0x30] sm:$0xf]
    %v348 = vld [vmem:[#allocation8 + $0x34] sm:$0xf]
    %v349 = vld [vmem:[#allocation8 + $0x38] sm:$0xf]
    %v350 = vld [vmem:[#allocation8 + $0x3c] sm:$0xf]
    %v351 = vld [vmem:[#allocation8 + $0x40] sm:$0xf]
    %v352 = vld [vmem:[#allocation8 + $0x44] sm:$0xf]
    %v353 = vld [vmem:[#allocation8 + $0x48] sm:$0xf]
    %v354 = vld [vmem:[#allocation8 + $0x4c] sm:$0xf]
    %v355 = vld [vmem:[#allocation8 + $0x50] sm:$0xf]
    %v356 = vld [vmem:[#allocation8 + $0x54] sm:$0xf]
    %v357 = vld [vmem:[#allocation8 + $0x58] sm:$0xf]
    %v358 = vld [vmem:[#allocation8 + $0x5c] sm:$0xf]
    %v359 = vld [vmem:[#allocation8 + $0x60] sm:$0xf]
    %v360 = vld [vmem:[#allocation8 + $0x64] sm:$0xf]
    %v361 = vld [vmem:[#allocation8 + $0x68] sm:$0xf]
    %v362 = vld [vmem:[#allocation8 + $0x6c] sm:$0xf]
    %v363 = vld [vmem:[#allocation8 + $0x70] sm:$0xf]
    %v364 = vld [vmem:[#allocation8 + $0x74] sm:$0xf]
    %v365 = vld [vmem:[#allocation8 + $0x78] sm:$0xf]
    %v366 = vld [vmem:[#allocation8 + $0x7c] sm:$0xf]
    %v367 = vld [vmem:[%s6] sm:$0x1]
    %v369 = vlaneseq
    %v370 = vshrl.u32 %v369, 7
    %v371 = vsub.s32 0, %v370
    %v372 = vrot.slane %v367, %v371
    %v406 = vunpack.c.l.b16 %v335
    %v407 = vunpack.c.l.b16 %v336
    %v408 = vunpack.c.l.b16 %v337
    %v409 = vunpack.c.l.b16 %v338
    %v410 = vunpack.c.l.b16 %v339
    %v411 = vunpack.c.l.b16 %v340
    %v412 = vunpack.c.l.b16 %v341
    %v413 = vunpack.c.l.b16 %v342
    %v414 = vunpack.c.l.b16 %v343
    %v415 = vunpack.c.l.b16 %v344
    %v416 = vunpack.c.l.b16 %v345
    %v417 = vunpack.c.l.b16 %v346
    %v418 = vunpack.c.l.b16 %v347
    %v419 = vunpack.c.l.b16 %v348
    %v420 = vunpack.c.l.b16 %v349
    %v421 = vunpack.c.l.b16 %v350
    %v422 = vunpack.c.l.b16 %v351
    %v423 = vunpack.c.l.b16 %v352
    %v424 = vunpack.c.l.b16 %v353
    %v425 = vunpack.c.l.b16 %v354
    %v426 = vunpack.c.l.b16 %v355
    %v427 = vunpack.c.l.b16 %v356
    %v428 = vunpack.c.l.b16 %v357
    %v429 = vunpack.c.l.b16 %v358
    %v430 = vunpack.c.l.b16 %v359
    %v431 = vunpack.c.l.b16 %v360
    %v432 = vunpack.c.l.b16 %v361
    %v433 = vunpack.c.l.b16 %v362
    %v434 = vunpack.c.l.b16 %v363
    %v435 = vunpack.c.l.b16 %v364
    %v436 = vunpack.c.l.b16 %v365
    %v437 = vunpack.c.l.b16 %v366
    %v438 = vpack.c.b16 %v407, %v406
    %v439 = vpack.c.b16 %v409, %v408
    %v440 = vpack.c.b16 %v411, %v410
    %v441 = vpack.c.b16 %v413, %v412
    %v442 = vpack.c.b16 %v415, %v414
    %v443 = vpack.c.b16 %v417, %v416
    %v444 = vpack.c.b16 %v419, %v418
    %v445 = vpack.c.b16 %v421, %v420
    %v446 = vpack.c.b16 %v423, %v422
    %v447 = vpack.c.b16 %v425, %v424
    %v448 = vpack.c.b16 %v427, %v426
    %v449 = vpack.c.b16 %v429, %v428
    %v450 = vpack.c.b16 %v431, %v430
    %v451 = vpack.c.b16 %v433, %v432
    %v452 = vpack.c.b16 %v435, %v434
    %v453 = vpack.c.b16 %v437, %v436
    %470 = vmatprep.subr.bf16.mxu0 0
    %471 = vmatpush1.bf16.msra.mxu0 %v438
    %472 = vmatprep.subr.bf16.mxu0 0
    %473 = vmatpush1.bf16.msra.mxu0 %v439
    %474 = vmatprep.subr.bf16.mxu0 0
    %475 = vmatpush1.bf16.msra.mxu0 %v440
    %476 = vmatprep.subr.bf16.mxu0 0
    %477 = vmatpush1.bf16.msra.mxu0 %v441
    %478 = vmatprep.subr.bf16.mxu0 0
    %479 = vmatpush1.bf16.msra.mxu0 %v442
    %480 = vmatprep.subr.bf16.mxu0 0
    %481 = vmatpush1.bf16.msra.mxu0 %v443
    %482 = vmatprep.subr.bf16.mxu0 0
    %483 = vmatpush1.bf16.msra.mxu0 %v444
    %484 = vmatprep.subr.bf16.mxu0 0
    %485 = vmatpush1.bf16.msra.mxu0 %v445
    %486 = vmatprep.subr.bf16.mxu0 0
    %487 = vmatpush1.bf16.msra.mxu0 %v446
    %488 = vmatprep.subr.bf16.mxu0 0
    %489 = vmatpush1.bf16.msra.mxu0 %v447
    %490 = vmatprep.subr.bf16.mxu0 0
    %491 = vmatpush1.bf16.msra.mxu0 %v448
    %492 = vmatprep.subr.bf16.mxu0 0
    %493 = vmatpush1.bf16.msra.mxu0 %v449
    %494 = vmatprep.subr.bf16.mxu0 0
    %495 = vmatpush1.bf16.msra.mxu0 %v450
    %496 = vmatprep.subr.bf16.mxu0 0
    %497 = vmatpush1.bf16.msra.mxu0 %v451
    %498 = vmatprep.subr.bf16.mxu0 0
    %499 = vmatpush1.bf16.msra.mxu0 %v452
    %500 = vmatprep.subr.bf16.mxu0 0
    %501 = vmatpush1.bf16.msra.mxu0 %v453
    %502 = vmatprep.mubr.bf16.mxu0 %v334
    %503 = vmatmul.mubr.bf16.gmra.mrb[0].mxu0 %v333
    %v504 = vpop.f32.mrb[0].mxu0
    %v505 = vadd.f32 %v372, %v504
    %v506 = vpop.f32.mrb[0].mxu0
    %v507 = vpop.f32.mrb[0].mxu0
    %v508 = vadd.f32 %v372, %v507
    %v509 = vpop.f32.mrb[0].mxu0
    %510 = vdwg.mxu0
    %511 = vst [vmem:[#allocation9] sm:$0xff] %v505
    %512 = vst [vmem:[#allocation9 + $0x8] sm:$0xff] %v508
    // Predicated region
    $region46: #{tpu_custom_call.1} parent=1 // pred_check
      _
    $region47: #{tpu_custom_call.1} parent=1 // pred_check_branch
      %514 = sbr.rel (0) target = $region49
    $region48: #{tpu_custom_call.1} parent=1 // pred_region
      %s516 = ssub.s32 256, 256
      %517 = vsyncadd [#allocation5], %s516
      %s518 = sshll.u32 [#allocation9], 4
      %s519 = int_to_ptr.vmem [resolvable:$true] %s518
      %524 = dma.vmem_to_hbm [thread:$0]  %s519, 256, %s7, [#allocation5], 128, 128, 8
    $region49: #{tpu_custom_call.1} parent=1 // pred_fallthru
      _
    // Predicated region
    $region50: #{tpu_custom_call.1} parent=1 // pred_check
      _
    $region51: #{tpu_custom_call.1} parent=1 // pred_check_branch
      %526 = sbr.rel (0) target = $region53
    $region52: #{tpu_custom_call.1} parent=1 // pred_region
      %527 = dma.done [#allocation5], 256
    $region53: #{tpu_custom_call.1} parent=1 // pred_fallthru
      _
    %528 = vsyncpa [#allocation4], 1
    %529 = vsyncpa [#allocation7], 1
    %530 = vsyncpa [#allocation5], 1

// kernel: tpu_custom_call.1
$region0: #{tpu_custom_call.1}
  #allocation0 [shape = 'u32[]', space=smem, size = 0x4, offset = 0x4, fixed_abs, tag = 'smem constant byte address 0x4 - core index']
  #allocation1 [shape = 'u32[144,128]{1,0:T(1,128)}', space=vmem, size = 0x12000, scoped, tag = 'internal scratch']
  #allocation2 [shape = 'bf16[16,256]{1,0:T(16,128)(2,1)}', space=vmem, size = 0x2000, scoped, tag = 'scratch operand']
  %s0 = inlined_call_operand.hbm [shape: f32[16,128], index: 0, kind: input, shape index: {}]
  %s1 = inlined_call_operand.hbm [shape: bf16[128,256], index: 1, kind: input, shape index: {}]
  %s2 = inlined_call_operand.vmem [shape: f32[1,256], index: 2, kind: input, shape index: {}]
  %s3 = inlined_call_operand.vmem [shape: f32[1,256], index: 3, kind: input, shape index: {}]
  %s4 = inlined_call_operand.vmem [shape: f32[1,256], index: 4, kind: input, shape index: {}]
  %s5 = inlined_call_operand.hbm [shape: bf16[256,128], index: 5, kind: input, shape index: {}]
  %s6 = inlined_call_operand.vmem [shape: f32[1,128], index: 6, kind: input, shape index: {}]
  %s7 = inlined_call_operand.hbm [shape: f32[16,128], index: 7, kind: output, shape index: {}]
  %s8 = sld [smem:[#allocation0]]
  $region54: #{tpu_custom_call.1} parent=0
    _
  %s10 = ssub.s32 1, %s8
  %s11 = scalar_select 0, %s10, %s8
  $region1: #{tpu_custom_call.1} parent=0
    #allocation3 [shape = 'u8[8192]{0}', space=vmem, size = 0x2000, scoped, tag = 'input window, operand 0, single buffered']
    #allocation4 [shape = 's32[1]{0}', space=sflag, size = 0x4, scoped, tag = 'scoped memory for tpu_custom_call.1']
    #allocation5 [shape = 's32[1]{0}', space=sflag, size = 0x4, scoped, tag = 'scoped memory for tpu_custom_call.1']
    #allocation6 [shape = 'u8[65536]{0}', space=vmem, size = 0x10000, scoped, tag = 'input window, operand 1, single buffered']
    #allocation7 [shape = 's32[1]{0}', space=sflag, size = 0x4, scoped, tag = 'scoped memory for tpu_custom_call.1']
    #allocation8 [shape = 'u8[65536]{0}', space=vmem, size = 0x10000, scoped, tag = 'input window, operand 5, single buffered']
    #allocation9 [shape = 'u8[8192]{0}', space=vmem, size = 0x2000, scoped, tag = 'output window, operand 0, single buffered']
    %12 = vsyncpa [#allocation4], 0
    %13 = vsyncpa [#allocation7], 0
    %14 = vsyncpa [#allocation5], 0
    // Predicated region
    $region2: #{tpu_custom_call.1} parent=1 // pred_check
      _
    $region3: #{tpu_custom_call.1} parent=1 // pred_check_branch
      %16 = sbr.rel (0) target = $region5
    $region4: #{tpu_custom_call.1} parent=1 // pred_region
      %s18 = ssub.s32 256, 256
      %19 = vsyncadd [#allocation4], %s18
      %s20 = sshll.u32 [#allocation3], 4
      %s21 = int_to_ptr.vmem [resolvable:$true] %s20
      %26 = dma.hbm_to_vmem [thread:$0]  %s0, 256, %s21, [#allocation4], 128, 128, 8
    $region5: #{tpu_custom_call.1} parent=1 // pred_fallthru
      _
    // Predicated region
    $region6: #{tpu_custom_call.1} parent=1 // pred_check
      _
    $region7: #{tpu_custom_call.1} parent=1 // pred_check_branch
      %28 = sbr.rel (0) target = $region9
    $region8: #{tpu_custom_call.1} parent=1 // pred_region
      %s30 = ssub.s32 2048, 2048
      %31 = vsyncadd [#allocation7], %s30
      %s32 = sshll.u32 [#allocation6], 4
      %s33 = int_to_ptr.vmem [resolvable:$true] %s32
      %38 = dma.hbm_to_vmem [thread:$0]  %s1, 2048, %s33, [#allocation7], 128, 128, 8
    $region9: #{tpu_custom_call.1} parent=1 // pred_fallthru
      _
    // Predicated region
    $region10: #{tpu_custom_call.1} parent=1 // pred_check
      _
    $region11: #{tpu_custom_call.1} parent=1 // pred_check_branch
      %40 = sbr.rel (0) target = $region13
    $region12: #{tpu_custom_call.1} parent=1 // pred_region
      _
    $region13: #{tpu_custom_call.1} parent=1 // pred_fallthru
      _
    // Predicated region
    $region14: #{tpu_custom_call.1} parent=1 // pred_check
      _
    $region15: #{tpu_custom_call.1} parent=1 // pred_check_branch
      %42 = sbr.rel (0) target = $region17
    $region16: #{tpu_custom_call.1} parent=1 // pred_region
      _
    $region17: #{tpu_custom_call.1} parent=1 // pred_fallthru
      _
    // Predicated region
    $region18: #{tpu_custom_call.1} parent=1 // pred_check
      _
    $region19: #{tpu_custom_call.1} parent=1 // pred_check_branch
      %44 = sbr.rel (0) target = $region21
    $region20: #{tpu_custom_call.1} parent=1 // pred_region
      _
    $region21: #{tpu_custom_call.1} parent=1 // pred_fallthru
      _
    // Predicated region
    $region22: #{tpu_custom_call.1} parent=1 // pred_check
      _
    $region23: #{tpu_custom_call.1} parent=1 // pred_check_branch
      %46 = sbr.rel (0) target = $region25
    $region24: #{tpu_custom_call.1} parent=1 // pred_region
      %s48 = ssub.s32 2048, 2048
      %49 = vsyncadd [#allocation7], %s48
      %s50 = sshll.u32 [#allocation8], 4
      %s51 = int_to_ptr.vmem [resolvable:$true] %s50
      %56 = dma.hbm_to_vmem [thread:$0]  %s5, 2048, %s51, [#allocation7], 64, 64, 4
    $region25: #{tpu_custom_call.1} parent=1 // pred_fallthru
      _
    // Predicated region
    $region26: #{tpu_custom_call.1} parent=1 // pred_check
      _
    $region27: #{tpu_custom_call.1} parent=1 // pred_check_branch
      %58 = sbr.rel (0) target = $region29
    $region28: #{tpu_custom_call.1} parent=1 // pred_region
      _
    $region29: #{tpu_custom_call.1} parent=1 // pred_fallthru
      _
    // Predicated region
    $region30: #{tpu_custom_call.1} parent=1 // pred_check
      _
    $region31: #{tpu_custom_call.1} parent=1 // pred_check_branch
      %60 = sbr.rel (0) target = $region33
    $region32: #{tpu_custom_call.1} parent=1 // pred_region
      %61 = dma.done [#allocation4], 256
    $region33: #{tpu_custom_call.1} parent=1 // pred_fallthru
      _
    // Predicated region
    $region34: #{tpu_custom_call.1} parent=1 // pred_check
      _
    $region35: #{tpu_custom_call.1} parent=1 // pred_check_branch
      %63 = sbr.rel (0) target = $region37
    $region36: #{tpu_custom_call.1} parent=1 // pred_region
      %64 = dma.done [#allocation7], 2048
    $region37: #{tpu_custom_call.1} parent=1 // pred_fallthru
      _
    // Predicated region
    $region38: #{tpu_custom_call.1} parent=1 // pred_check
      _
    $region39: #{tpu_custom_call.1} parent=1 // pred_check_branch
      %66 = sbr.rel (0) target = $region41
    $region40: #{tpu_custom_call.1} parent=1 // pred_region
      %67 = dma.done [#allocation7], 2048
    $region41: #{tpu_custom_call.1} parent=1 // pred_fallthru
      _
    %p69 = scmp.eq.s32.totalorder 0, 0
    // Predicated region
    $region42: #{tpu_custom_call.1} parent=1 // pred_check
      %p70 = pneg %p69
    $region43: #{tpu_custom_call.1} parent=1 // pred_check_branch
      %72 = sbr.rel (%p70) target = $region45
    $region44: #{tpu_custom_call.1} parent=1 // pred_region
      %v73 = vld [vmem:[#allocation3] sm:$0xff]
      %v74 = vld [vmem:[#allocation3 + $0x8] sm:$0xff]
      %v75 = vpack.c.bf16 %v74, %v73
      %v76 = vld [vmem:[#allocation6] sm:$0xff]
      %v77 = vld [vmem:[#allocation6 + $0x8] sm:$0xff]
      %v78 = vld [vmem:[#allocation6 + $0x10] sm:$0xff]
      %v79 = vld [vmem:[#allocation6 + $0x18] sm:$0xff]
      %v80 = vld [vmem:[#allocation6 + $0x20] sm:$0xff]
      %v81 = vld [vmem:[#allocation6 + $0x28] sm:$0xff]
      %v82 = vld [vmem:[#allocation6 + $0x30] sm:$0xff]
      %v83 = vld [vmem:[#allocation6 + $0x38] sm:$0xff]
      %v84 = vld [vmem:[#allocation6 + $0x40] sm:$0xff]
      %v85 = vld [vmem:[#allocation6 + $0x48] sm:$0xff]
      %v86 = vld [vmem:[#allocation6 + $0x50] sm:$0xff]
      %v87 = vld [vmem:[#allocation6 + $0x58] sm:$0xff]
      %v88 = vld [vmem:[#allocation6 + $0x60] sm:$0xff]
      %v89 = vld [vmem:[#allocation6 + $0x68] sm:$0xff]
      %v90 = vld [vmem:[#allocation6 + $0x70] sm:$0xff]
      %v91 = vld [vmem:[#allocation6 + $0x78] sm:$0xff]
      %v92 = vld [vmem:[%s2] sm:$0x3]
      %v94 = vlaneseq
      %v95 = vshrl.u32 %v94, 7
      %v96 = vsub.s32 0, %v95
      %v97 = vrot.slane %v92, %v96
      %v98 = vlaneseq
      %v99 = vshrl.u32 %v98, 7
      %v100 = vsub.s32 1, %v99
      %v101 = vrot.slane %v92, %v100
      %v120 = vunpack.c.l.b16 %v76
      %v121 = vunpack.c.h.b16 %v76
      %v122 = vunpack.c.l.b16 %v77
      %v123 = vunpack.c.h.b16 %v77
      %v124 = vunpack.c.l.b16 %v78
      %v125 = vunpack.c.h.b16 %v78
      %v126 = vunpack.c.l.b16 %v79
      %v127 = vunpack.c.h.b16 %v79
      %v128 = vunpack.c.l.b16 %v80
      %v129 = vunpack.c.h.b16 %v80
      %v130 = vunpack.c.l.b16 %v81
      %v131 = vunpack.c.h.b16 %v81
      %v132 = vunpack.c.l.b16 %v82
      %v133 = vunpack.c.h.b16 %v82
      %v134 = vunpack.c.l.b16 %v83
      %v135 = vunpack.c.h.b16 %v83
      %v136 = vunpack.c.l.b16 %v84
      %v137 = vunpack.c.h.b16 %v84
      %v138 = vunpack.c.l.b16 %v85
      %v139 = vunpack.c.h.b16 %v85
      %v140 = vunpack.c.l.b16 %v86
      %v141 = vunpack.c.h.b16 %v86
      %v142 = vunpack.c.l.b16 %v87
      %v143 = vunpack.c.h.b16 %v87
      %v144 = vunpack.c.l.b16 %v88
      %v145 = vunpack.c.h.b16 %v88
      %v146 = vunpack.c.l.b16 %v89
      %v147 = vunpack.c.h.b16 %v89
      %v148 = vunpack.c.l.b16 %v90
      %v149 = vunpack.c.h.b16 %v90
      %v150 = vunpack.c.l.b16 %v91
      %v151 = vunpack.c.h.b16 %v91
      %v152 = vpack.c.b16 %v122, %v120
      %v153 = vpack.c.b16 %v123, %v121
      %v154 = vpack.c.b16 %v126, %v124
      %v155 = vpack.c.b16 %v127, %v125
      %v156 = vpack.c.b16 %v130, %v128
      %v157 = vpack.c.b16 %v131, %v129
      %v158 = vpack.c.b16 %v134, %v132
      %v159 = vpack.c.b16 %v135, %v133
      %v160 = vpack.c.b16 %v138, %v136
      %v161 = vpack.c.b16 %v139, %v137
      %v162 = vpack.c.b16 %v142, %v140
      %v163 = vpack.c.b16 %v143, %v141
      %v164 = vpack.c.b16 %v146, %v144
      %v165 = vpack.c.b16 %v147, %v145
      %v166 = vpack.c.b16 %v150, %v148
      %v167 = vpack.c.b16 %v151, %v149
      %184 = vmatprep.subr.bf16.mxu0 %v153
      %185 = vmatpush1.bf16.msra.mxu0 %v152
      %186 = vmatprep.subr.bf16.mxu0 %v155
      %187 = vmatpush1.bf16.msra.mxu0 %v154
      %188 = vmatprep.subr.bf16.mxu0 %v157
      %189 = vmatpush1.bf16.msra.mxu0 %v156
      %190 = vmatprep.subr.bf16.mxu0 %v159
      %191 = vmatpush1.bf16.msra.mxu0 %v158
      %192 = vmatprep.subr.bf16.mxu0 %v161
      %193 = vmatpush1.bf16.msra.mxu0 %v160
      %194 = vmatprep.subr.bf16.mxu0 %v163
      %195 = vmatpush1.bf16.msra.mxu0 %v162
      %196 = vmatprep.subr.bf16.mxu0 %v165
      %197 = vmatpush1.bf16.msra.mxu0 %v164
      %198 = vmatprep.subr.bf16.mxu0 %v167
      %199 = vmatpush1.bf16.msra.mxu0 %v166
      %200 = vmatprep.subr.bf16.mxu0 0
      %201 = vmatpush1.bf16.msra.mxu0 0
      %202 = vmatprep.subr.bf16.mxu0 0
      %203 = vmatpush1.bf16.msra.mxu0 0
      %204 = vmatprep.subr.bf16.mxu0 0
      %205 = vmatpush1.bf16.msra.mxu0 0
      %206 = vmatprep.subr.bf16.mxu0 0
      %207 = vmatpush1.bf16.msra.mxu0 0
      %208 = vmatprep.subr.bf16.mxu0 0
      %209 = vmatpush1.bf16.msra.mxu0 0
      %210 = vmatprep.subr.bf16.mxu0 0
      %211 = vmatpush1.bf16.msra.mxu0 0
      %212 = vmatprep.subr.bf16.mxu0 0
      %213 = vmatpush1.bf16.msra.mxu0 0
      %214 = vmatprep.subr.bf16.mxu0 0
      %215 = vmatpush1.bf16.msra.mxu0 0
      %216 = vmatprep.mubr.bf16.mxu0 0
      %217 = vmatmul.mubr.bf16.gmra.mrb[0].mxu0 %v75
      %v218 = vpop.f32.mrb[0].mxu0
      %v219 = vadd.f32 %v97, %v218
      %v220 = vpop.f32.mrb[0].mxu0
      %v221 = vadd.f32 %v101, %v220
      %v222 = vpop.f32.mrb[0].mxu0
      %v223 = vadd.f32 %v97, %v222
      %v224 = vpop.f32.mrb[0].mxu0
      %v225 = vadd.f32 %v101, %v224
      %226 = vdwg.mxu0
      %v227 = vmax.f32 %v219, %v221
      %228 = vmax.xlane.f32.xlu0 %v227
      %v229 = vpop.xlane.xlu0 %228
      %v230 = vmax.f32 %v223, %v225
      %231 = vmax.xlane.f32.xlu0 %v230
      %v232 = vpop.xlane.xlu0 %231
      %v233 = vsub.f32 %v219, %v229
      %v234 = vsub.f32 %v221, %v229
      %v235 = vsub.f32 %v223, %v232
      %v236 = vsub.f32 %v225, %v232
      %v237 = vmul.f32 %v233, 1.442695
      %v238 = vpow.pop %v237
      %v239 = vmul.f32 %v234, 1.442695
      %v240 = vpow.pop %v239
      %v241 = vmul.f32 %v235, 1.442695
      %v242 = vpow.pop %v241
      %v243 = vmul.f32 %v236, 1.442695
      %v244 = vpow.pop %v243
      %v245 = vadd.f32 %v238, %v240
      %246 = vadd.xlane.f32.xlu0 %v245
      %v247 = vpop.xlane.xlu0 %246
      %v248 = vadd.f32 %v242, %v244
      %249 = vadd.xlane.f32.xlu0 %v248
      %v250 = vpop.xlane.xlu0 %249
      %v251 = vrcp.pop %v247
      %v252 = vrcp.pop %v250
      %v253 = vmul.f32 %v238, %v251
      %v254 = vmul.f32 %v240, %v251
      %v255 = vmul.f32 %v242, %v252
      %v256 = vmul.f32 %v244, %v252
      %v257 = vmul.f32 %v219, %v253
      %v258 = vmul.f32 %v221, %v254
      %v259 = vmul.f32 %v223, %v255
      %v260 = vmul.f32 %v225, %v256
      %v261 = vadd.f32 %v257, %v258
      %262 = vadd.xlane.f32.xlu0 %v261
      %v263 = vpop.xlane.xlu0 %262
      %v264 = vadd.f32 %v259, %v260
      %265 = vadd.xlane.f32.xlu0 %v264
      %v266 = vpop.xlane.xlu0 %265
      %v267 = vmul.f32 %v263, 0.00390625
      %v268 = vmul.f32 %v266, 0.00390625
      %v269 = vmul.f32 %v257, %v257
      %v270 = vmul.f32 %v258, %v258
      %v271 = vmul.f32 %v259, %v259
      %v272 = vmul.f32 %v260, %v260
      %v273 = vadd.f32 %v269, %v270
      %274 = vadd.xlane.f32.xlu0 %v273
      %v275 = vpop.xlane.xlu0 %274
      %v276 = vadd.f32 %v271, %v272
      %277 = vadd.xlane.f32.xlu0 %v276
      %v278 = vpop.xlane.xlu0 %277
      %v279 = vmul.f32 %v275, 0.00390625
      %v280 = vmul.f32 %v278, 0.00390625
      %v281 = vmul.f32 %v267, %v267
      %v282 = vmul.f32 %v268, %v268
      %v283 = vsub.f32 %v279, %v281
      %v284 = vsub.f32 %v280, %v282
      %v285 = vsub.f32 %v257, %v267
      %v286 = vsub.f32 %v258, %v267
      %v287 = vsub.f32 %v259, %v268
      %v288 = vsub.f32 %v260, %v268
      %v289 = vadd.f32 %v283, 1e-05
      %v290 = vadd.f32 %v284, 1e-05
      %v291 = vrsqrt.pop %v289
      %v292 = vrsqrt.pop %v290
      %v293 = vmul.f32 %v285, %v291
      %v294 = vmul.f32 %v286, %v291
      %v295 = vmul.f32 %v287, %v292
      %v296 = vmul.f32 %v288, %v292
      %v297 = vld [vmem:[%s3] sm:$0x3]
      %v299 = vlaneseq
      %v300 = vshrl.u32 %v299, 7
      %v301 = vsub.s32 0, %v300
      %v302 = vrot.slane %v297, %v301
      %v303 = vlaneseq
      %v304 = vshrl.u32 %v303, 7
      %v305 = vsub.s32 1, %v304
      %v306 = vrot.slane %v297, %v305
      %v309 = vmul.f32 %v293, %v302
      %v310 = vmul.f32 %v294, %v306
      %v311 = vmul.f32 %v295, %v302
      %v312 = vmul.f32 %v296, %v306
      %v313 = vld [vmem:[%s4] sm:$0x3]
      %v315 = vlaneseq
      %v316 = vshrl.u32 %v315, 7
      %v317 = vsub.s32 0, %v316
      %v318 = vrot.slane %v313, %v317
      %v319 = vlaneseq
      %v320 = vshrl.u32 %v319, 7
      %v321 = vsub.s32 1, %v320
      %v322 = vrot.slane %v313, %v321
      %v325 = vadd.f32 %v309, %v318
      %v326 = vadd.f32 %v310, %v322
      %v327 = vadd.f32 %v311, %v318
      %v328 = vadd.f32 %v312, %v322
      %v329 = vpack.c.bf16 %v327, %v325
      %v330 = vpack.c.bf16 %v328, %v326
      %331 = vst [vmem:[#allocation2] sm:$0xff] %v329
      %332 = vst [vmem:[#allocation2 + $0x8] sm:$0xff] %v330
    $region45: #{tpu_custom_call.1} parent=1 // pred_fallthru
      _
    %v333 = vld [vmem:[#allocation2] sm:$0xff]
    %v334 = vld [vmem:[#allocation2 + $0x8] sm:$0xff]
    %v335 = vld [vmem:[#allocation8] sm:$0xf]
    %v336 = vld [vmem:[#allocation8 + $0x4] sm:$0xf]
    %v337 = vld [vmem:[#allocation8 + $0x8] sm:$0xf]
    %v338 = vld [vmem:[#allocation8 + $0xc] sm:$0xf]
    %v339 = vld [vmem:[#allocation8 + $0x10] sm:$0xf]
    %v340 = vld [vmem:[#allocation8 + $0x14] sm:$0xf]
    %v341 = vld [vmem:[#allocation8 + $0x18] sm:$0xf]
    %v342 = vld [vmem:[#allocation8 + $0x1c] sm:$0xf]
    %v343 = vld [vmem:[#allocation8 + $0x20] sm:$0xf]
    %v344 = vld [vmem:[#allocation8 + $0x24] sm:$0xf]
    %v345 = vld [vmem:[#allocation8 + $0x28] sm:$0xf]
    %v346 = vld [vmem:[#allocation8 + $0x2c] sm:$0xf]
    %v347 = vld [vmem:[#allocation8 + $0x30] sm:$0xf]
    %v348 = vld [vmem:[#allocation8 + $0x34] sm:$0xf]
    %v349 = vld [vmem:[#allocation8 + $0x38] sm:$0xf]
    %v350 = vld [vmem:[#allocation8 + $0x3c] sm:$0xf]
    %v351 = vld [vmem:[#allocation8 + $0x40] sm:$0xf]
    %v352 = vld [vmem:[#allocation8 + $0x44] sm:$0xf]
    %v353 = vld [vmem:[#allocation8 + $0x48] sm:$0xf]
    %v354 = vld [vmem:[#allocation8 + $0x4c] sm:$0xf]
    %v355 = vld [vmem:[#allocation8 + $0x50] sm:$0xf]
    %v356 = vld [vmem:[#allocation8 + $0x54] sm:$0xf]
    %v357 = vld [vmem:[#allocation8 + $0x58] sm:$0xf]
    %v358 = vld [vmem:[#allocation8 + $0x5c] sm:$0xf]
    %v359 = vld [vmem:[#allocation8 + $0x60] sm:$0xf]
    %v360 = vld [vmem:[#allocation8 + $0x64] sm:$0xf]
    %v361 = vld [vmem:[#allocation8 + $0x68] sm:$0xf]
    %v362 = vld [vmem:[#allocation8 + $0x6c] sm:$0xf]
    %v363 = vld [vmem:[#allocation8 + $0x70] sm:$0xf]
    %v364 = vld [vmem:[#allocation8 + $0x74] sm:$0xf]
    %v365 = vld [vmem:[#allocation8 + $0x78] sm:$0xf]
    %v366 = vld [vmem:[#allocation8 + $0x7c] sm:$0xf]
    %v367 = vld [vmem:[%s6] sm:$0x1]
    %v369 = vlaneseq
    %v370 = vshrl.u32 %v369, 7
    %v371 = vsub.s32 0, %v370
    %v372 = vrot.slane %v367, %v371
    %v406 = vunpack.c.l.b16 %v335
    %v407 = vunpack.c.l.b16 %v336
    %v408 = vunpack.c.l.b16 %v337
    %v409 = vunpack.c.l.b16 %v338
    %v410 = vunpack.c.l.b16 %v339
    %v411 = vunpack.c.l.b16 %v340
    %v412 = vunpack.c.l.b16 %v341
    %v413 = vunpack.c.l.b16 %v342
    %v414 = vunpack.c.l.b16 %v343
    %v415 = vunpack.c.l.b16 %v344
    %v416 = vunpack.c.l.b16 %v345
    %v417 = vunpack.c.l.b16 %v346
    %v418 = vunpack.c.l.b16 %v347
    %v419 = vunpack.c.l.b16 %v348
    %v420 = vunpack.c.l.b16 %v349
    %v421 = vunpack.c.l.b16 %v350
    %v422 = vunpack.c.l.b16 %v351
    %v423 = vunpack.c.l.b16 %v352
    %v424 = vunpack.c.l.b16 %v353
    %v425 = vunpack.c.l.b16 %v354
    %v426 = vunpack.c.l.b16 %v355
    %v427 = vunpack.c.l.b16 %v356
    %v428 = vunpack.c.l.b16 %v357
    %v429 = vunpack.c.l.b16 %v358
    %v430 = vunpack.c.l.b16 %v359
    %v431 = vunpack.c.l.b16 %v360
    %v432 = vunpack.c.l.b16 %v361
    %v433 = vunpack.c.l.b16 %v362
    %v434 = vunpack.c.l.b16 %v363
    %v435 = vunpack.c.l.b16 %v364
    %v436 = vunpack.c.l.b16 %v365
    %v437 = vunpack.c.l.b16 %v366
    %v438 = vpack.c.b16 %v407, %v406
    %v439 = vpack.c.b16 %v409, %v408
    %v440 = vpack.c.b16 %v411, %v410
    %v441 = vpack.c.b16 %v413, %v412
    %v442 = vpack.c.b16 %v415, %v414
    %v443 = vpack.c.b16 %v417, %v416
    %v444 = vpack.c.b16 %v419, %v418
    %v445 = vpack.c.b16 %v421, %v420
    %v446 = vpack.c.b16 %v423, %v422
    %v447 = vpack.c.b16 %v425, %v424
    %v448 = vpack.c.b16 %v427, %v426
    %v449 = vpack.c.b16 %v429, %v428
    %v450 = vpack.c.b16 %v431, %v430
    %v451 = vpack.c.b16 %v433, %v432
    %v452 = vpack.c.b16 %v435, %v434
    %v453 = vpack.c.b16 %v437, %v436
    %470 = vmatprep.subr.bf16.mxu0 0
    %471 = vmatpush1.bf16.msra.mxu0 %v438
    %472 = vmatprep.subr.bf16.mxu0 0
    %473 = vmatpush1.bf16.msra.mxu0 %v439
    %474 = vmatprep.subr.bf16.mxu0 0
    %475 = vmatpush1.bf16.msra.mxu0 %v440
    %476 = vmatprep.subr.bf16.mxu0 0
    %477 = vmatpush1.bf16.msra.mxu0 %v441
    %478 = vmatprep.subr.bf16.mxu0 0
    %479 = vmatpush1.bf16.msra.mxu0 %v442
    %480 = vmatprep.subr.bf16.mxu0 0
    %481 = vmatpush1.bf16.msra.mxu0 %v443
    %482 = vmatprep.subr.bf16.mxu0 0
    %483 = vmatpush1.bf16.msra.mxu0 %v444
    %484 = vmatprep.subr.bf16.mxu0 0
    %485 = vmatpush1.bf16.msra.mxu0 %v445
    %486 = vmatprep.subr.bf16.mxu0 0
    %487 = vmatpush1.bf16.msra.mxu0 %v446
    %488 = vmatprep.subr.bf16.mxu0 0
    %489 = vmatpush1.bf16.msra.mxu0 %v447
    %490 = vmatprep.subr.bf16.mxu0 0
    %491 = vmatpush1.bf16.msra.mxu0 %v448
    %492 = vmatprep.subr.bf16.mxu0 0
    %493 = vmatpush1.bf16.msra.mxu0 %v449
    %494 = vmatprep.subr.bf16.mxu0 0
    %495 = vmatpush1.bf16.msra.mxu0 %v450
    %496 = vmatprep.subr.bf16.mxu0 0
    %497 = vmatpush1.bf16.msra.mxu0 %v451
    %498 = vmatprep.subr.bf16.mxu0 0
    %499 = vmatpush1.bf16.msra.mxu0 %v452
    %500 = vmatprep.subr.bf16.mxu0 0
    %501 = vmatpush1.bf16.msra.mxu0 %v453
    %502 = vmatprep.mubr.bf16.mxu0 %v334
    %503 = vmatmul.mubr.bf16.gmra.mrb[0].mxu0 %v333
    %v504 = vpop.f32.mrb[0].mxu0
    %v505 = vadd.f32 %v372, %v504
    %v506 = vpop.f32.mrb[0].mxu0
    %v507 = vpop.f32.mrb[0].mxu0
    %v508 = vadd.f32 %v372, %v507
    %v509 = vpop.f32.mrb[0].mxu0
    %510 = vdwg.mxu0
    %511 = vst [vmem:[#allocation9] sm:$0xff] %v505
    %512 = vst [vmem:[#allocation9 + $0x8] sm:$0xff] %v508
    // Predicated region
    $region46: #{tpu_custom_call.1} parent=1 // pred_check
      _
    $region47: #{tpu_custom_call.1} parent=1 // pred_check_branch
      %514 = sbr.rel (0) target = $region49
    $region48: #{tpu_custom_call.1} parent=1 // pred_region
      %s516 = ssub.s32 256, 256
      %517 = vsyncadd [#allocation5], %s516
      %s518 = sshll.u32 [#allocation9], 4
      %s519 = int_to_ptr.vmem [resolvable:$true] %s518
      %524 = dma.vmem_to_hbm [thread:$0]  %s519, 256, %s7, [#allocation5], 128, 128, 8
    $region49: #{tpu_custom_call.1} parent=1 // pred_fallthru
      _
    // Predicated region
    $region50: #{tpu_custom_call.1} parent=1 // pred_check
      _
    $region51: #{tpu_custom_call.1} parent=1 // pred_check_branch
      %526 = sbr.rel (0) target = $region53
    $region52: #{tpu_custom_call.1} parent=1 // pred_region
      %527 = dma.done [#allocation5], 256
    $region53: #{tpu_custom_call.1} parent=1 // pred_fallthru
      _
    %528 = vsyncpa [#allocation4], 1
    %529 = vsyncpa [#allocation7], 1
    %530 = vsyncpa [#allocation5], 1

</llo_original>
